<compile_context>
chip_gen: v5e
topology: v5e:2x2
jax: 0.10.0
libtpu: 0.0.40
codegen_flags: <defaults>
</compile_context>

<pallas_src>
import functools

import numpy as np
import jax
import jax.numpy as jnp
from jax import lax
from jax.experimental import pallas as pl
from jax.experimental.pallas import tpu as pltpu


def _round_up(x, m):
    return ((x + m - 1) // m) * m


def _tv_kernel(hmask_ref, wmask_ref, x_ref, out_ref, acc_h_ref, acc_w_ref, *,
               num_chunks, chunk, planes_per_block, blocks_per_core, n_planes,
               hw, img_w, mask_tail):
    """Accumulates squared vertical / horizontal neighbour differences.

    hmask_ref / wmask_ref : (1, HW) f32 {0,1} validity masks (precomputed).
    x_ref                 : (P, HW) block of flattened planes (input dtype).
    out_ref               : (2, chunk, HW) f32 per-core partial sums (written
                            once, on the last step of the reduction axis).
    acc_h_ref / acc_w_ref : (chunk, HW) f32 VMEM accumulators.
    """
    c = pl.program_id(0)          # core-split index ("parallel")
    i = pl.program_id(1)          # plane-block index ("arbitrary" reduction)

    @pl.when(i == 0)
    def _():
        acc_h_ref[...] = jnp.zeros_like(acc_h_ref)
        acc_w_ref[...] = jnp.zeros_like(acc_w_ref)

    hmask = hmask_ref[...]
    wmask = wmask_ref[...]
    # Logical index of the first plane held by this block (may exceed n_planes
    # for redundant tail blocks of the core split; those are masked below).
    plane0 = (c * blocks_per_core + i) * planes_per_block

    def body(j, carry):
        base = pl.multiple_of(j * chunk, chunk)
        xc = x_ref[pl.ds(base, chunk), :].astype(jnp.float32)      # (chunk, HW)
        if mask_tail:
            pid = plane0 + base + lax.broadcasted_iota(jnp.int32, (chunk, 1), 0)
            xc = jnp.where(pid < n_planes, xc, 0.0)
        # Neighbour values via full-width lane rotation (XLU slot; keeps the
        # load single and the accumulator stores lane-dense):
        #   roll(x, HW-W)[i] == x[i+W]  (row below),
        #   roll(x, HW-1)[i] == x[i+1]  (column to the right).
        dh = (pltpu.roll(xc, hw - img_w, axis=1) - xc) * hmask
        dw = (pltpu.roll(xc, hw - 1, axis=1) - xc) * wmask
        # TODO(synk): v7x micro-opt — even/odd accumulator pairs to break the
        # per-chunk VMEM RMW dependency chain (negligible on v5e/v6e).
        acc_h_ref[...] += dh * dh
        acc_w_ref[...] += dw * dw
        return carry

    lax.fori_loop(0, num_chunks, body, 0, unroll=min(num_chunks, 4))

    @pl.when(i == pl.num_programs(1) - 1)
    def _():
        out_ref[0] = acc_h_ref[...]
        out_ref[1] = acc_w_ref[...]


def tv_loss(x, tv_loss_weight=1.0):
    """TV loss matching PyTorch TVLoss.forward. x: (B, C, H, W). Scalar f32."""
    B, C, H, W = x.shape
    N = B * C
    HW = H * W
    itemsize = jnp.dtype(x.dtype).itemsize

    # Lane-dense layout: each plane becomes one length-HW row (trailing-dim
    # merge => free reshape, no extra HBM traffic).
    planes = x.reshape(N, HW)

    # ---- generation-aware VMEM budget (v7x: 64 MiB, v5e/v6e: 128 MiB) ------
    try:
        vmem_cap = int(pltpu.get_tpu_info().vmem_capacity_bytes)
    except Exception:
        vmem_cap = 64 * 1024 * 1024
    vmem_budget = max(min(vmem_cap * 3 // 4, 100 * 1024 * 1024),
                      32 * 1024 * 1024)

    # ---- tile sizing from the (8,128)-tiled VMEM footprint ------------------
    hw_pad = _round_up(HW, 128)              # lane-padded plane footprint
    # Planes per inner fori_loop step: f32 temporaries (xc/rolled/dh/dw) stay
    # around <= 512 KiB each, multiple of 8 (f32 sublane), no more than N needs.
    chunk = (512 * 1024) // (hw_pad * 4)
    chunk = max(8, min((chunk // 8) * 8, _round_up(N, 8), 1024))

    plane_bytes = hw_pad * itemsize          # per plane, lane-padded, input dtype
    acc_bytes = 2 * chunk * hw_pad * 4       # persistent f32 accumulators
    out_bytes = 2 * 2 * chunk * hw_pad * 4   # (2, chunk, HW) f32 out, dbl-buffered
    tmp_bytes = 6 * chunk * hw_pad * 4       # loop temporaries (generous)
    avail = vmem_budget - acc_bytes - out_bytes - tmp_bytes - (2 << 20)
    # Double-buffered input block; a single block is capped at 24 MiB.
    block_bytes = max(min(avail // 2, 24 << 20), chunk * plane_bytes)
    p = max(chunk, (block_bytes // plane_bytes) // chunk * chunk)
    p = min(p, _round_up(N, chunk))
    num_chunks = p // chunk

    blocks = pl.cdiv(N, p)
    # Dual-TensorCore split (v7x / megacore parts): only when it costs no (or
    # little) redundant HBM traffic on single-core chips.
    splits = 2 if (blocks >= 2 and (blocks % 2 == 0 or blocks >= 9)) else 1
    bpc = pl.cdiv(blocks, splits)
    mask_tail = (splits * bpc * p != N)
    last_block = blocks - 1

    # ---- precomputed 0/1 validity masks (exclude last row / last column) ---
    pos = np.arange(HW)
    hmask = jnp.asarray((pos < HW - W).astype(np.float32).reshape(1, HW))
    wmask = jnp.asarray(((pos % W) < (W - 1)).astype(np.float32).reshape(1, HW))

    kernel = functools.partial(
        _tv_kernel,
        num_chunks=num_chunks, chunk=chunk, planes_per_block=p,
        blocks_per_core=bpc, n_planes=N, hw=HW, img_w=W, mask_tail=mask_tail)

    partials = pl.pallas_call(
        kernel,
        out_shape=jax.ShapeDtypeStruct((splits, 2, chunk, HW), jnp.float32),
        grid=(splits, bpc),
        in_specs=[
            pl.BlockSpec((1, HW), lambda c, i: (0, 0)),       # hmask (resident)
            pl.BlockSpec((1, HW), lambda c, i: (0, 0)),       # wmask (resident)
            pl.BlockSpec((p, HW),
                         lambda c, i: (jnp.minimum(c * bpc + i, last_block), 0)),
        ],
        out_specs=pl.BlockSpec((None, 2, chunk, HW), lambda c, i: (c, 0, 0, 0)),
        scratch_shapes=[
            pltpu.VMEM((chunk, HW), jnp.float32),
            pltpu.VMEM((chunk, HW), jnp.float32),
        ],
        compiler_params=pltpu.CompilerParams(
            dimension_semantics=("parallel", "arbitrary"),
            vmem_limit_bytes=int(vmem_budget),
        ),
    )(hmask, wmask, planes)

    h_tv = jnp.sum(partials[:, 0])
    w_tv = jnp.sum(partials[:, 1])

    # PyTorch: count_h = C*(H-1)*W ; count_w = C*H*(W-1)
    count_h = jnp.float32(C * (H - 1) * W)
    count_w = jnp.float32(C * H * (W - 1))
    return (jnp.float32(tv_loss_weight) * 2.0
            * (h_tv / count_h + w_tv / count_w) / jnp.float32(B))


def _tv_loss_ref(x, tv_loss_weight=1.0):
    """Pure-JAX reference for verification."""
    B, C, H, W = x.shape
    h_tv = jnp.sum((x[:, :, 1:, :] - x[:, :, :-1, :]) ** 2)
    w_tv = jnp.sum((x[:, :, :, 1:] - x[:, :, :, :-1]) ** 2)
    count_h = C * (H - 1) * W
    count_w = C * H * (W - 1)
    return tv_loss_weight * 2.0 * (h_tv / count_h + w_tv / count_w) / B


if __name__ == "__main__":
    key = jax.random.PRNGKey(0)

    # Primary shape from the module spec.
    B, C, H, W = 2, 4, 16, 16
    x = jax.random.normal(key, (B, C, H, W), dtype=jnp.float32)
    out = jax.block_until_ready(tv_loss(x, tv_loss_weight=1.0))
    ref = _tv_loss_ref(x, tv_loss_weight=1.0)
    assert jnp.allclose(out, ref, rtol=1e-5, atol=1e-5), (out, ref)

    # Secondary shape: non-square plane + ragged plane count, exercising the
    # in-kernel tail masking that replaced the jnp.pad full-tensor copy.
    x2 = jax.random.normal(jax.random.PRNGKey(1), (2, 3, 16, 24),
                           dtype=jnp.float32)
    out2 = jax.block_until_ready(tv_loss(x2, tv_loss_weight=0.5))
    ref2 = _tv_loss_ref(x2, tv_loss_weight=0.5)
    assert jnp.allclose(out2, ref2, rtol=1e-5, atol=1e-5), (out2, ref2)

    print("KERNEL_OK")
</pallas_src>

<mosaic_0001>
module attributes {stable_mosaic.version = 11 : i64} {
  func.func @_tv_kernel(%arg0: i32, %arg1: i32, %arg2: memref<1x256xf32, #tpu.memory_space<vmem>>, %arg3: memref<1x256xf32, #tpu.memory_space<vmem>>, %arg4: memref<8x256xf32, #tpu.memory_space<vmem>>, %arg5: memref<1x2x8x256xf32, #tpu.memory_space<vmem>>, %arg6: memref<8x256xf32, #tpu.memory_space<vmem>>, %arg7: memref<8x256xf32, #tpu.memory_space<vmem>>) attributes {dimension_semantics = [#tpu.dimension_semantics<parallel>, #tpu.dimension_semantics<arbitrary>], iteration_bounds = array<i64: 1, 1>, scalar_prefetch = 0 : i64, scratch_operands = 2 : i64, tpu.core_type = #tpu.core_type<tc>, window_params = [{pipeline_mode = #tpu.pipeline_mode<synchronous>, transform_indices = @transform_0, window_bounds = array<i64: 1, 256>}, {pipeline_mode = #tpu.pipeline_mode<synchronous>, transform_indices = @transform_1, window_bounds = array<i64: 1, 256>}, {transform_indices = @transform_2, window_bounds = array<i64: 8, 256>}, {transform_indices = @transform_3, window_bounds = array<i64: 1, 2, 8, 256>}]} {
    %c0_i32 = arith.constant 0 : i32
    %0 = arith.cmpi eq, %arg1, %c0_i32 : i32
    %1 = arith.extui %0 : i1 to i32
    %c0_i32_0 = arith.constant 0 : i32
    %2 = arith.cmpi ne, %1, %c0_i32_0 : i32
    scf.if %2 {
      %cst = arith.constant 0.000000e+00 : f32
      %28 = vector.broadcast %cst : f32 to vector<8x256xf32>
      %c0_16 = arith.constant 0 : index
      %c0_17 = arith.constant 0 : index
      %29 = vector.load %arg6[%c0_16, %c0_17] : memref<8x256xf32, #tpu.memory_space<vmem>>, vector<8x256xf32>
      tpu.vector_store %arg6[%c0_16, %c0_17], %28 {strides = array<i32>} : memref<8x256xf32, #tpu.memory_space<vmem>>, vector<8x256xf32>,
      %cst_18 = arith.constant 0.000000e+00 : f32
      %30 = vector.broadcast %cst_18 : f32 to vector<8x256xf32>
      %c0_19 = arith.constant 0 : index
      %c0_20 = arith.constant 0 : index
      %31 = vector.load %arg7[%c0_19, %c0_20] : memref<8x256xf32, #tpu.memory_space<vmem>>, vector<8x256xf32>
      tpu.vector_store %arg7[%c0_19, %c0_20], %30 {strides = array<i32>} : memref<8x256xf32, #tpu.memory_space<vmem>>, vector<8x256xf32>,
    } else {
    }
    %c0 = arith.constant 0 : index
    %c0_1 = arith.constant 0 : index
    %3 = vector.load %arg2[%c0, %c0_1] : memref<1x256xf32, #tpu.memory_space<vmem>>, vector<1x256xf32>
    %c0_2 = arith.constant 0 : index
    %c0_3 = arith.constant 0 : index
    %4 = vector.load %arg3[%c0_2, %c0_3] : memref<1x256xf32, #tpu.memory_space<vmem>>, vector<1x256xf32>
    %c0_i32_4 = arith.constant 0 : i32
    %c8_i32 = arith.constant 8 : i32
    %5 = arith.muli %c0_i32_4, %c8_i32 : i32
    %6 = tpu.assume_multiple %5, 8 : i32
    %7 = arith.index_cast %6 : i32 to index
    %c0_5 = arith.constant 0 : index
    %8 = vector.load %arg4[%7, %c0_5] : memref<8x256xf32, #tpu.memory_space<vmem>>, vector<8x256xf32>
    %c240_i32 = arith.constant 240 : i32
    %9 = tpu.dynamic_rotate %8 by %c240_i32 dim 1 : vector<8x256xf32>, i32 -> vector<8x256xf32>
    %10 = arith.subf %9, %8 : vector<8x256xf32>
    %11 = vector.broadcast %3 : vector<1x256xf32> to vector<8x256xf32>
    %12 = arith.mulf %10, %11 : vector<8x256xf32>
    %c255_i32 = arith.constant 255 : i32
    %13 = tpu.dynamic_rotate %8 by %c255_i32 dim 1 : vector<8x256xf32>, i32 -> vector<8x256xf32>
    %14 = arith.subf %13, %8 : vector<8x256xf32>
    %15 = vector.broadcast %4 : vector<1x256xf32> to vector<8x256xf32>
    %16 = arith.mulf %14, %15 : vector<8x256xf32>
    %c0_6 = arith.constant 0 : index
    %c0_7 = arith.constant 0 : index
    %17 = vector.load %arg6[%c0_6, %c0_7] : memref<8x256xf32, #tpu.memory_space<vmem>>, vector<8x256xf32>
    %18 = arith.mulf %12, %12 : vector<8x256xf32>
    %19 = arith.addf %17, %18 : vector<8x256xf32>
    %c0_8 = arith.constant 0 : index
    %c0_9 = arith.constant 0 : index
    %20 = vector.load %arg6[%c0_8, %c0_9] : memref<8x256xf32, #tpu.memory_space<vmem>>, vector<8x256xf32>
    tpu.vector_store %arg6[%c0_8, %c0_9], %19 {strides = array<i32>} : memref<8x256xf32, #tpu.memory_space<vmem>>, vector<8x256xf32>,
    %c0_10 = arith.constant 0 : index
    %c0_11 = arith.constant 0 : index
    %21 = vector.load %arg7[%c0_10, %c0_11] : memref<8x256xf32, #tpu.memory_space<vmem>>, vector<8x256xf32>
    %22 = arith.mulf %16, %16 : vector<8x256xf32>
    %23 = arith.addf %21, %22 : vector<8x256xf32>
    %c0_12 = arith.constant 0 : index
    %c0_13 = arith.constant 0 : index
    %24 = vector.load %arg7[%c0_12, %c0_13] : memref<8x256xf32, #tpu.memory_space<vmem>>, vector<8x256xf32>
    tpu.vector_store %arg7[%c0_12, %c0_13], %23 {strides = array<i32>} : memref<8x256xf32, #tpu.memory_space<vmem>>, vector<8x256xf32>,
    %c1_i32 = arith.constant 1 : i32
    %c0_i32_14 = arith.constant 0 : i32
    %25 = arith.cmpi eq, %arg1, %c0_i32_14 : i32
    %26 = arith.extui %25 : i1 to i32
    %c0_i32_15 = arith.constant 0 : i32
    %27 = arith.cmpi ne, %26, %c0_i32_15 : i32
    scf.if %27 {
      %c0_16 = arith.constant 0 : index
      %c0_17 = arith.constant 0 : index
      %28 = vector.load %arg6[%c0_16, %c0_17] : memref<8x256xf32, #tpu.memory_space<vmem>>, vector<8x256xf32>
      %c0_18 = arith.constant 0 : index
      %c0_19 = arith.constant 0 : index
      %c0_20 = arith.constant 0 : index
      %c0_21 = arith.constant 0 : index
      %29 = vector.load %arg5[%c0_18, %c0_19, %c0_20, %c0_21] : memref<1x2x8x256xf32, #tpu.memory_space<vmem>>, vector<1x1x8x256xf32>
      %30 = vector.shape_cast %29 : vector<1x1x8x256xf32> to vector<8x256xf32>
      %31 = vector.shape_cast %28 : vector<8x256xf32> to vector<1x1x8x256xf32>
      tpu.vector_store %arg5[%c0_18, %c0_19, %c0_20, %c0_21], %31 {strides = array<i32>} : memref<1x2x8x256xf32, #tpu.memory_space<vmem>>, vector<1x1x8x256xf32>,
      %c0_22 = arith.constant 0 : index
      %c0_23 = arith.constant 0 : index
      %32 = vector.load %arg7[%c0_22, %c0_23] : memref<8x256xf32, #tpu.memory_space<vmem>>, vector<8x256xf32>
      %c0_24 = arith.constant 0 : index
      %c1 = arith.constant 1 : index
      %c0_25 = arith.constant 0 : index
      %c0_26 = arith.constant 0 : index
      %33 = vector.load %arg5[%c0_24, %c1, %c0_25, %c0_26] : memref<1x2x8x256xf32, #tpu.memory_space<vmem>>, vector<1x1x8x256xf32>
      %34 = vector.shape_cast %33 : vector<1x1x8x256xf32> to vector<8x256xf32>
      %35 = vector.shape_cast %32 : vector<8x256xf32> to vector<1x1x8x256xf32>
      tpu.vector_store %arg5[%c0_24, %c1, %c0_25, %c0_26], %35 {strides = array<i32>} : memref<1x2x8x256xf32, #tpu.memory_space<vmem>>, vector<1x1x8x256xf32>,
    } else {
    }
    return
  }
  func.func @transform_0(%arg0: i32, %arg1: i32) -> (i32, i32) {
    %c0_i32 = arith.constant 0 : i32
    %c0_i32_0 = arith.constant 0 : i32
    %c0_i32_1 = arith.constant 0 : i32
    return %c0_i32, %c0_i32_0 : i32, i32
  }
  func.func @transform_1(%arg0: i32, %arg1: i32) -> (i32, i32) {
    %c0_i32 = arith.constant 0 : i32
    %c0_i32_0 = arith.constant 0 : i32
    %c0_i32_1 = arith.constant 0 : i32
    return %c0_i32, %c0_i32_0 : i32, i32
  }
  func.func @transform_2(%arg0: i32, %arg1: i32) -> (i32, i32) {
    %c1_i32 = arith.constant 1 : i32
    %0 = arith.muli %arg0, %c1_i32 : i32
    %1 = arith.addi %0, %arg1 : i32
    %c0_i32 = arith.constant 0 : i32
    %2 = arith.minsi %1, %c0_i32 : i32
    %c0_i32_0 = arith.constant 0 : i32
    %c0_i32_1 = arith.constant 0 : i32
    return %2, %c0_i32_0 : i32, i32
  }
  func.func @transform_3(%arg0: i32, %arg1: i32) -> (i32, i32, i32, i32) {
    %c0_i32 = arith.constant 0 : i32
    %c0_i32_0 = arith.constant 0 : i32
    %c0_i32_1 = arith.constant 0 : i32
    %c0_i32_2 = arith.constant 0 : i32
    return %arg0, %c0_i32, %c0_i32_0, %c0_i32_1 : i32, i32, i32, i32
  }
}

</mosaic_0001>

<llo_original>
// kernel: tpu_custom_call.1
$region0: #{tpu_custom_call.1}
  #allocation0 [shape = 'u32[]', space=smem, size = 0x4, offset = 0x4, fixed_abs, tag = 'smem constant byte address 0x4 - core index']
  #allocation1 [shape = 'u32[72,128]{1,0:T(1,128)}', space=vmem, size = 0x9000, scoped, tag = 'internal scratch']
  #allocation2 [shape = 'f32[8,256]{1,0:T(8,128)}', space=vmem, size = 0x2000, scoped, tag = 'scratch operand']
  #allocation3 [shape = 'f32[8,256]{1,0:T(8,128)}', space=vmem, size = 0x2000, scoped, tag = 'scratch operand']
  %s0 = inlined_call_operand.hbm [shape: f32[1,256], index: 0, kind: input, shape index: {}]
  %s1 = inlined_call_operand.hbm [shape: f32[1,256], index: 1, kind: input, shape index: {}]
  %s2 = inlined_call_operand.hbm [shape: f32[8,256], index: 2, kind: input, shape index: {}]
  %s3 = inlined_call_operand.hbm [shape: f32[1,2,8,256], index: 3, kind: output, shape index: {}]
  %s4 = sld [smem:[#allocation0]]
  $region42: #{tpu_custom_call.1} parent=0
    _
  %s6 = ssub.s32 1, %s4
  %s7 = scalar_select 0, %s6, %s4
  $region1: #{tpu_custom_call.1} parent=0
    #allocation4 [shape = 'u8[1024]{0}', space=vmem, size = 0x400, scoped, tag = 'input window, operand 0, single buffered']
    #allocation5 [shape = 's32[1]{0}', space=sflag, size = 0x4, scoped, tag = 'scoped memory for tpu_custom_call.1']
    #allocation6 [shape = 's32[1]{0}', space=sflag, size = 0x4, scoped, tag = 'scoped memory for tpu_custom_call.1']
    #allocation7 [shape = 'u8[1024]{0}', space=vmem, size = 0x400, scoped, tag = 'input window, operand 1, single buffered']
    #allocation8 [shape = 's32[1]{0}', space=sflag, size = 0x4, scoped, tag = 'scoped memory for tpu_custom_call.1']
    #allocation9 [shape = 'u8[8192]{0}', space=vmem, size = 0x2000, scoped, tag = 'input window, operand 2, single buffered']
    #allocation10 [shape = 'u8[16384]{0}', space=vmem, size = 0x4000, scoped, tag = 'output window, operand 0, single buffered']
    %8 = vsyncpa [#allocation5], 0
    %9 = vsyncpa [#allocation8], 0
    %10 = vsyncpa [#allocation6], 0
    // Predicated region
    $region2: #{tpu_custom_call.1} parent=1 // pred_check
      _
    $region3: #{tpu_custom_call.1} parent=1 // pred_check_branch
      %12 = sbr.rel (0) target = $region5
    $region4: #{tpu_custom_call.1} parent=1 // pred_region
      %14 = vsyncadd [#allocation5], 0
      %s16 = sshll.u32 %s0, 4
      %s17 = int_to_ptr.hbm [resolvable:$true] %s16
      %s18 = sshll.u32 [#allocation4], 4
      %s19 = int_to_ptr.vmem [resolvable:$true] %s18
      %21 = dma.hbm_to_vmem [thread:$0]  %s17, 32, %s19, [#allocation5]
    $region5: #{tpu_custom_call.1} parent=1 // pred_fallthru
      _
    // Predicated region
    $region6: #{tpu_custom_call.1} parent=1 // pred_check
      _
    $region7: #{tpu_custom_call.1} parent=1 // pred_check_branch
      %23 = sbr.rel (0) target = $region9
    $region8: #{tpu_custom_call.1} parent=1 // pred_region
      %25 = vsyncadd [#allocation8], 0
      %s27 = sshll.u32 %s1, 4
      %s28 = int_to_ptr.hbm [resolvable:$true] %s27
      %s29 = sshll.u32 [#allocation7], 4
      %s30 = int_to_ptr.vmem [resolvable:$true] %s29
      %32 = dma.hbm_to_vmem [thread:$0]  %s28, 32, %s30, [#allocation8]
    $region9: #{tpu_custom_call.1} parent=1 // pred_fallthru
      _
    // Predicated region
    $region10: #{tpu_custom_call.1} parent=1 // pred_check
      _
    $region11: #{tpu_custom_call.1} parent=1 // pred_check_branch
      %34 = sbr.rel (0) target = $region13
    $region12: #{tpu_custom_call.1} parent=1 // pred_region
      %s35 = sadd.s32 0, 0
      %p36 = scmp.lt.s32.totalorder %s35, 0
      %s37 = scalar_select %p36, %s35, 0
      %39 = vsyncadd [#allocation8], 0
      %s40 = smul.addr %s37, 2
      %s41 = smul.addr %s40, 8
      %s42 = scalar_lea.hbm %s2, %s41
      %s44 = sshll.u32 %s42, 4
      %s45 = int_to_ptr.hbm [resolvable:$true] %s44
      %s46 = sshll.u32 [#allocation9], 4
      %s47 = int_to_ptr.vmem [resolvable:$true] %s46
      %49 = dma.hbm_to_vmem [thread:$0]  %s45, 256, %s47, [#allocation8]
    $region13: #{tpu_custom_call.1} parent=1 // pred_fallthru
      _
    // Predicated region
    $region14: #{tpu_custom_call.1} parent=1 // pred_check
      _
    $region15: #{tpu_custom_call.1} parent=1 // pred_check_branch
      %51 = sbr.rel (0) target = $region17
    $region16: #{tpu_custom_call.1} parent=1 // pred_region
      %53 = dma.done [#allocation5], 32
    $region17: #{tpu_custom_call.1} parent=1 // pred_fallthru
      _
    // Predicated region
    $region18: #{tpu_custom_call.1} parent=1 // pred_check
      _
    $region19: #{tpu_custom_call.1} parent=1 // pred_check_branch
      %55 = sbr.rel (0) target = $region21
    $region20: #{tpu_custom_call.1} parent=1 // pred_region
      %57 = dma.done [#allocation8], 32
    $region21: #{tpu_custom_call.1} parent=1 // pred_fallthru
      _
    // Predicated region
    $region22: #{tpu_custom_call.1} parent=1 // pred_check
      _
    $region23: #{tpu_custom_call.1} parent=1 // pred_check_branch
      %59 = sbr.rel (0) target = $region25
    $region24: #{tpu_custom_call.1} parent=1 // pred_region
      %61 = dma.done [#allocation8], 256
    $region25: #{tpu_custom_call.1} parent=1 // pred_fallthru
      _
    %s62 = sadd.s32 0, 0
    %p63 = scmp.lt.s32.totalorder %s62, 0
    %s64 = scalar_select %p63, %s62, 0
    %p65 = scmp.eq.s32.totalorder 0, 0
    // Predicated region
    $region26: #{tpu_custom_call.1} parent=1 // pred_check
      %p66 = pneg %p65
    $region27: #{tpu_custom_call.1} parent=1 // pred_check_branch
      %68 = sbr.rel (%p66) target = $region29
    $region28: #{tpu_custom_call.1} parent=1 // pred_region
      %69 = vst [vmem:[#allocation2] sm:$0xff] 0.0
      %70 = vst [vmem:[#allocation2 + $0x8] sm:$0xff] 0.0
      %71 = vst [vmem:[#allocation3] sm:$0xff] 0.0
      %72 = vst [vmem:[#allocation3 + $0x8] sm:$0xff] 0.0
    $region29: #{tpu_custom_call.1} parent=1 // pred_fallthru
      _
    %v73 = vld [vmem:[#allocation4] sm:$0x3]
    %v74 = vld [vmem:[#allocation7] sm:$0x3]
    %s75 = smul.u32 0, 2
    %s76 = smul.addr %s75, 8
    %s77 = scalar_lea.vmem [#allocation9], %s76
    %v78 = vld [vmem:[%s77] sm:$0xff]
    %v79 = vld [vmem:[%s77 + $0x8] sm:$0xff]
    %80 = vrot.lane.b32.xlu0 %v78, 112
    %v81 = vpop.permute.xlu0 %80
    %82 = vrot.lane.b32.xlu0 %v79, 112
    %v83 = vpop.permute.xlu0 %82
    %v84 = vlaneseq
    %v85 = vand.u32 %v84, 127
    %vm86 = vcmp.lt.s32.totalorder %v85, 112
    %v87 = vsel %vm86, %v81, %v83
    %v88 = vsel %vm86, %v83, %v81
    %v89 = vsub.f32 %v87, %v78
    %v90 = vsub.f32 %v88, %v79
    %v92 = vperm.slane %v73, 0
    %v93 = vperm.slane %v73, 1
    %v96 = vmul.f32 %v89, %v92
    %v97 = vmul.f32 %v90, %v93
    %98 = vrot.lane.b32.xlu0 %v78, 127
    %v99 = vpop.permute.xlu0 %98
    %100 = vrot.lane.b32.xlu0 %v79, 127
    %v101 = vpop.permute.xlu0 %100
    %vm102 = vcmp.lt.s32.totalorder %v85, 127
    %v103 = vsel %vm102, %v99, %v101
    %v104 = vsel %vm102, %v101, %v99
    %v105 = vsub.f32 %v103, %v78
    %v106 = vsub.f32 %v104, %v79
    %v108 = vperm.slane %v74, 0
    %v109 = vperm.slane %v74, 1
    %v112 = vmul.f32 %v105, %v108
    %v113 = vmul.f32 %v106, %v109
    %v114 = vld [vmem:[#allocation2] sm:$0xff]
    %v115 = vld [vmem:[#allocation2 + $0x8] sm:$0xff]
    %v116 = vmul.f32 %v96, %v96
    %v117 = vmul.f32 %v97, %v97
    %v118 = vadd.f32 %v114, %v116
    %v119 = vadd.f32 %v115, %v117
    %120 = vst [vmem:[#allocation2] sm:$0xff] %v118
    %121 = vst [vmem:[#allocation2 + $0x8] sm:$0xff] %v119
    %v122 = vld [vmem:[#allocation3] sm:$0xff]
    %v123 = vld [vmem:[#allocation3 + $0x8] sm:$0xff]
    %v124 = vmul.f32 %v112, %v112
    %v125 = vmul.f32 %v113, %v113
    %v126 = vadd.f32 %v122, %v124
    %v127 = vadd.f32 %v123, %v125
    %128 = vst [vmem:[#allocation3] sm:$0xff] %v126
    %129 = vst [vmem:[#allocation3 + $0x8] sm:$0xff] %v127
    // Predicated region
    $region30: #{tpu_custom_call.1} parent=1 // pred_check
      %p130 = pneg %p65
    $region31: #{tpu_custom_call.1} parent=1 // pred_check_branch
      %132 = sbr.rel (%p130) target = $region33
    $region32: #{tpu_custom_call.1} parent=1 // pred_region
      %v133 = vld [vmem:[#allocation2] sm:$0xff]
      %v134 = vld [vmem:[#allocation2 + $0x8] sm:$0xff]
      %135 = vst [vmem:[#allocation10] sm:$0xff] %v133
      %136 = vst [vmem:[#allocation10 + $0x8] sm:$0xff] %v134
      %v137 = vld [vmem:[#allocation3] sm:$0xff]
      %v138 = vld [vmem:[#allocation3 + $0x8] sm:$0xff]
      %s139 = scalar_lea.vmem [#allocation10], 16
      %140 = vst [vmem:[%s139] sm:$0xff] %v137
      %141 = vst [vmem:[%s139 + $0x8] sm:$0xff] %v138
    $region33: #{tpu_custom_call.1} parent=1 // pred_fallthru
      _
    // Predicated region
    $region34: #{tpu_custom_call.1} parent=1 // pred_check
      _
    $region35: #{tpu_custom_call.1} parent=1 // pred_check_branch
      %143 = sbr.rel (0) target = $region37
    $region36: #{tpu_custom_call.1} parent=1 // pred_region
      %145 = vsyncadd [#allocation6], 0
      %s146 = sshll.u32 [#allocation10], 4
      %s147 = int_to_ptr.vmem [resolvable:$true] %s146
      %s148 = sshll.u32 %s3, 4
      %s149 = int_to_ptr.hbm [resolvable:$true] %s148
      %154 = dma.vmem_to_hbm [thread:$0]  %s147, 512, %s149, [#allocation6], 256, 256, 16
    $region37: #{tpu_custom_call.1} parent=1 // pred_fallthru
      _
    // Predicated region
    $region38: #{tpu_custom_call.1} parent=1 // pred_check
      _
    $region39: #{tpu_custom_call.1} parent=1 // pred_check_branch
      %156 = sbr.rel (0) target = $region41
    $region40: #{tpu_custom_call.1} parent=1 // pred_region
      %158 = dma.done [#allocation6], 512
    $region41: #{tpu_custom_call.1} parent=1 // pred_fallthru
      _
    %159 = vsyncpa [#allocation5], 1
    %160 = vsyncpa [#allocation8], 1
    %161 = vsyncpa [#allocation6], 1

</llo_original>
